<compile_context>
chip_gen: v5e
topology: v5e:2x2
jax: 0.10.0
libtpu: 0.0.40
codegen_flags: <defaults>
</compile_context>

<pallas_src>
import functools

import jax
import jax.numpy as jnp
from jax import lax
from jax.experimental import pallas as pl
from jax.experimental.pallas import tpu as pltpu


def _round_up(x, m):
    return ((x + m - 1) // m) * m


# v7x has only 64 MiB VMEM per TensorCore -> keep resident weights <= 24 MiB
# (24*C^2 bytes in bf16, i.e. n_embd up to ~1024) so tiles/intermediates fit.
_RESIDENT_WEIGHT_BUDGET = 24 * 1024 * 1024
_VMEM_LIMIT = 64 * 1024 * 1024


# ---------------------------------------------------------------------------
# Shared per-hidden-tile math: one fused inner-projection matmul, SwiGLU in
# f32, then the partial second matmul (f32 accumulation).
# ---------------------------------------------------------------------------
def _swiglu_partial(x, w1_tile, b1_tile, w2_tile, tn):
    # w1_tile columns are packed [value | gate] for this hidden tile.
    h = jnp.dot(x, w1_tile, preferred_element_type=jnp.float32) + b1_tile
    value = h[:, :tn]
    gate = h[:, tn:]
    a = value * (gate * jax.nn.sigmoid(gate))          # silu(gate) * value, f32
    return jnp.dot(a.astype(w2_tile.dtype), w2_tile,
                   preferred_element_type=jnp.float32)


# ---------------------------------------------------------------------------
# Resident-weight kernel: 1-D grid over row tiles, weights live in VMEM for
# the whole call (DMA'd once), hidden tiles looped in-kernel.
# ---------------------------------------------------------------------------
def _mlp_resident_kernel(x_ref, w1_ref, b1_ref, w2_ref, b2_ref, o_ref, *,
                         tn, n_h):
    x = x_ref[...]                                     # (tm, C) bf16, loaded once
    two_tn = 2 * tn
    acc0 = jnp.zeros((x_ref.shape[0], o_ref.shape[1]), jnp.float32)

    def body(j, acc):
        hoff = pl.multiple_of(j * two_tn, 128)         # tn is a multiple of 128
        woff = pl.multiple_of(j * tn, 128)
        part = _swiglu_partial(
            x,
            w1_ref[:, pl.ds(hoff, two_tn)],
            b1_ref[:, pl.ds(hoff, two_tn)],
            w2_ref[pl.ds(woff, tn), :],
            tn)
        return acc + part

    acc = lax.fori_loop(0, n_h, body, acc0, unroll=(n_h <= 4))
    o_ref[...] = (acc + b2_ref[...]).astype(o_ref.dtype)


# ---------------------------------------------------------------------------
# Streamed-weight kernels: 2-D grid (row tiles, hidden tiles).  Weight tiles
# are double-buffered along the hidden (reduction) axis.
# ---------------------------------------------------------------------------
def _mlp_stream_kernel_f32(x_ref, w1_ref, b1_ref, w2_ref, b2_ref, o_ref):
    # f32 output: accumulate directly into the revisited output block
    # (no acc scratch -> saves tm*C*4 bytes of VMEM).
    j = pl.program_id(1)
    tn = w2_ref.shape[0]
    hoff = pl.multiple_of(j * 2 * tn, 128)
    part = _swiglu_partial(x_ref[...], w1_ref[...],
                           b1_ref[:, pl.ds(hoff, 2 * tn)], w2_ref[...], tn)

    @pl.when(j == 0)
    def _():
        o_ref[...] = b2_ref[...] + part                # b2 added exactly once

    @pl.when(j > 0)
    def _():
        o_ref[...] += part


def _mlp_stream_kernel_acc(x_ref, w1_ref, b1_ref, w2_ref, b2_ref, o_ref,
                           acc_ref):
    # Non-f32 output: f32 VMEM accumulator, init at j==0, finalize at last j.
    j = pl.program_id(1)
    tn = w2_ref.shape[0]

    @pl.when(j == 0)
    def _():
        acc_ref[...] = jnp.zeros_like(acc_ref)

    hoff = pl.multiple_of(j * 2 * tn, 128)
    acc_ref[...] += _swiglu_partial(x_ref[...], w1_ref[...],
                                    b1_ref[:, pl.ds(hoff, 2 * tn)],
                                    w2_ref[...], tn)

    @pl.when(j == pl.num_programs(1) - 1)
    def _():
        o_ref[...] = (acc_ref[...] + b2_ref[...]).astype(o_ref.dtype)


# ---------------------------------------------------------------------------
# Tiling heuristics
# ---------------------------------------------------------------------------
def _pick_tm(M, desired):
    """Row-tile size: minimize ragged-M padding waste, keep the parallel row
    axis >= 2 tiles for megacore (v7x), stay sublane aligned."""
    cap = _round_up(M, 8)
    desired = max(8, min(desired, cap))
    candidates = (1024, 768, 512, 384, 256, 128, 64, 32, 16, 8)

    tm = None
    for cand in candidates:                 # largest tile with <=1/8 padding waste
        if cand > desired:
            continue
        waste = _round_up(M, cand) - M
        if waste * 8 <= M:
            tm = cand
            break
    if tm is None:                          # fall back to min-waste candidate
        best = None
        for cand in candidates:
            if cand > desired:
                continue
            waste = _round_up(M, cand) - M
            key = (waste, -cand)
            if best is None or key < best[1]:
                best = (cand, key)
        tm = best[0] if best is not None else cap

    # Megacore: make sure grid dim 0 has at least 2 row tiles when possible.
    if _round_up(M, tm) // tm < 2 and tm > 8:
        half = max(8, _round_up(tm // 2, 8))
        if _round_up(M, half) // half >= 2:
            tm = half
    return tm


# ---------------------------------------------------------------------------
# Wrapper
# ---------------------------------------------------------------------------
@functools.partial(jax.jit, static_argnames=("tm", "tn", "force_stream"))
def mlp_forward(x, w1, b1, w2, b2, *, tm=None, tn=None, force_stream=False):
    """Fused SwiGLU MLP forward.

    x: (B, T, C); w1: (C, 8C) with [value | gate] column halves; b1: (8C,);
    w2: (4C, C); b2: (C,).  Dropout = 0 (eval), use_soft_experts = False.
    """
    B, T, C = x.shape
    M = B * T
    H = w2.shape[0]                                    # 4 * C
    assert w1.shape == (C, 2 * H)
    assert b1.shape == (2 * H,) and b2.shape == (C,)

    cdt = jnp.bfloat16                                 # MXU operand dtype
    out_dtype = x.dtype

    # ---- hidden-dim tiling (lane aligned: tn is always a multiple of 128) ----
    tn_eff = tn if tn is not None else (512 if C <= 2048 else 256)
    tn_eff = min(tn_eff, _round_up(H, 128))
    tn_eff = _round_up(tn_eff, 128)
    Hp = _round_up(H, tn_eff)
    n_h = Hp // tn_eff

    # ---- pack W1/b1: per hidden tile, [value | gate] columns are contiguous
    # so the kernel issues ONE inner-projection matmul per tile and slices at
    # a 128-aligned lane boundary. Zero-padded hidden columns contribute
    # exactly 0 (silu(0)*0 through zero W2 rows). ----
    w1v = w1[:, :H].astype(cdt)
    w1g = w1[:, H:].astype(cdt)
    b1v = b1[:H].astype(jnp.float32)
    b1g = b1[H:].astype(jnp.float32)
    if Hp != H:
        pad = Hp - H
        w1v = jnp.pad(w1v, ((0, 0), (0, pad)))
        w1g = jnp.pad(w1g, ((0, 0), (0, pad)))
        b1v = jnp.pad(b1v, (0, pad))
        b1g = jnp.pad(b1g, (0, pad))
    w1p = jnp.concatenate(
        [w1v.reshape(C, n_h, tn_eff), w1g.reshape(C, n_h, tn_eff)],
        axis=-1).reshape(C, 2 * Hp)
    b1p = jnp.concatenate(
        [b1v.reshape(n_h, tn_eff), b1g.reshape(n_h, tn_eff)],
        axis=-1).reshape(1, 2 * Hp)

    w2c = w2.astype(cdt)
    if Hp != H:
        w2c = jnp.pad(w2c, ((0, Hp - H), (0, 0)))
    b22 = b2.reshape(1, C).astype(jnp.float32)

    # ---- resident-weight vs streamed-weight decision ----
    weight_bytes = (w1p.size * 2 + w2c.size * 2 + b1p.size * 4 + b22.size * 4)
    resident = (not force_stream) and weight_bytes <= _RESIDENT_WEIGHT_BUDGET

    # ---- row tiling ----
    if tm is None:
        # Resident weights: tm only needs to amortize per-step overhead.
        # Streamed weights: tm sets weight-stream intensity (v6e wants
        # 768-1024; v7x 384-512 to respect 64 MiB VMEM) -- pass tm= per chip
        # for the last few percent.
        desired = 512 if resident else (
            768 if C <= 1024 else (512 if C <= 4096 else 256))
    else:
        desired = tm
    tm_eff = _pick_tm(M, desired)
    Mp = _round_up(M, tm_eff)
    n_row = Mp // tm_eff

    x2 = x.reshape(M, C).astype(cdt)
    if Mp != M:
        x2 = jnp.pad(x2, ((0, Mp - M), (0, 0)))

    out_shape = jax.ShapeDtypeStruct((Mp, C), out_dtype)
    vmem_full = pl.BlockSpec(memory_space=pltpu.MemorySpace.VMEM)

    flops = 6 * M * C * H                              # 2*M*C*2H + 2*M*H*C
    transcendentals = M * H

    if resident:
        kernel = functools.partial(_mlp_resident_kernel, tn=tn_eff, n_h=n_h)
        grid_spec = pltpu.PrefetchScalarGridSpec(
            num_scalar_prefetch=0,
            grid=(n_row,),
            in_specs=[
                pl.BlockSpec((tm_eff, C), lambda i: (i, 0)),   # x row tile
                vmem_full,                                     # W1 packed (resident)
                vmem_full,                                     # b1 packed (resident)
                vmem_full,                                     # W2 (resident)
                vmem_full,                                     # b2 (resident)
            ],
            out_specs=pl.BlockSpec((tm_eff, C), lambda i: (i, 0)),
        )
        dim_sem = ("parallel",)
        bytes_accessed = (x2.size * 2 + weight_bytes
                          + Mp * C * out_dtype.itemsize)
    else:
        if out_dtype == jnp.float32:
            kernel = _mlp_stream_kernel_f32
            scratch = []
        else:
            kernel = _mlp_stream_kernel_acc
            scratch = [pltpu.VMEM((tm_eff, C), jnp.float32)]
        grid_spec = pltpu.PrefetchScalarGridSpec(
            num_scalar_prefetch=0,
            grid=(n_row, n_h),
            in_specs=[
                pl.BlockSpec((tm_eff, C), lambda i, j: (i, 0)),      # x (revisited)
                pl.BlockSpec((C, 2 * tn_eff), lambda i, j: (0, j)),  # W1 packed tile
                vmem_full,                                           # b1 packed (full)
                pl.BlockSpec((tn_eff, C), lambda i, j: (j, 0)),      # W2 tile
                vmem_full,                                           # b2
            ],
            out_specs=pl.BlockSpec((tm_eff, C), lambda i, j: (i, 0)),
            scratch_shapes=scratch,
        )
        dim_sem = ("parallel", "arbitrary")
        # Weights are re-streamed once per row tile in this regime.
        bytes_accessed = (x2.size * 2
                          + n_row * (w1p.size * 2 + w2c.size * 2)
                          + b1p.size * 4 + b22.size * 4
                          + Mp * C * out_dtype.itemsize)

    cost = pl.CostEstimate(flops=int(flops),
                           transcendentals=int(transcendentals),
                           bytes_accessed=int(bytes_accessed))

    out = pl.pallas_call(
        kernel,
        out_shape=out_shape,
        grid_spec=grid_spec,
        compiler_params=pltpu.CompilerParams(
            dimension_semantics=dim_sem,
            vmem_limit_bytes=_VMEM_LIMIT,
        ),
        cost_estimate=cost,
    )(x2, w1p, b1p, w2c, b22)

    if Mp != M:
        out = out[:M]
    return out.reshape(B, T, C)


# ---------------------------------------------------------------------------
# Pure-JAX reference (cast=jnp.bfloat16 matches the kernel's MXU dtype).
# ---------------------------------------------------------------------------
def _reference(x, w1, b1, w2, b2, cast=None):
    if cast is not None:
        xm, w1m, w2m = x.astype(cast), w1.astype(cast), w2.astype(cast)
    else:
        xm, w1m, w2m = x, w1, w2
    h = jnp.einsum("btc,ch->bth", xm, w1m,
                   preferred_element_type=jnp.float32) + b1
    d = h.shape[-1] // 2
    value, gate = h[..., :d], h[..., d:]
    a = jax.nn.silu(gate) * value
    if cast is not None:
        a = a.astype(cast)
    y = jnp.einsum("bth,hc->btc", a, w2m,
                   preferred_element_type=jnp.float32) + b2
    return y.astype(x.dtype)


if __name__ == "__main__":
    # Small shapes consistent with the module's forward: x is (B, T, n_embd).
    B, T, n_embd = 2, 64, 32
    key = jax.random.PRNGKey(0)
    kx, k1, kb1, k2, kb2 = jax.random.split(key, 5)

    x = jax.random.normal(kx, (B, T, n_embd), dtype=jnp.float32)
    # mlp_inner_proj: Linear(n_embd, 2*(4*n_embd)), bias=True
    w1 = jax.random.normal(k1, (n_embd, 2 * 4 * n_embd), dtype=jnp.float32) * 0.05
    b1 = jax.random.normal(kb1, (2 * 4 * n_embd,), dtype=jnp.float32) * 0.01
    # mlp_out_proj: Linear(4*n_embd, n_embd), bias=True
    w2 = jax.random.normal(k2, (4 * n_embd, n_embd), dtype=jnp.float32) * 0.05
    b2 = jax.random.normal(kb2, (n_embd,), dtype=jnp.float32) * 0.01

    # TODO(synk): soft-experts branch (use_soft_experts=True) with shared /
    # non-shared expert einsums is not exercised here; only the standard MLP
    # path of the module is implemented.

    # Default path: weights fit VMEM -> resident-weight kernel.
    y_res = mlp_forward(x, w1, b1, w2, b2)
    # Fallback path: streamed weight tiles (exercised here for coverage).
    y_str = mlp_forward(x, w1, b1, w2, b2, force_stream=True)
    jax.block_until_ready((y_res, y_str))

    y_ref_bf16 = _reference(x, w1, b1, w2, b2, cast=jnp.bfloat16)
    y_ref_f32 = _reference(x, w1, b1, w2, b2, cast=None)
    for name, y in (("resident", y_res), ("streamed", y_str)):
        assert jnp.allclose(y, y_ref_bf16, atol=1e-4, rtol=1e-4), \
            f"{name}: mismatch vs bf16-matched reference"
        assert jnp.allclose(y, y_ref_f32, atol=2e-2, rtol=2e-2), \
            f"{name}: mismatch vs f32 reference"

    print("KERNEL_OK")
</pallas_src>

<mosaic_0001>
module attributes {stable_mosaic.version = 11 : i64} {
  func.func @_mlp_resident_kernel(%arg0: i32, %arg1: memref<64x32xbf16, #tpu.memory_space<vmem>>, %arg2: memref<32x256xbf16, #tpu.memory_space<vmem>>, %arg3: memref<1x256xf32, #tpu.memory_space<vmem>>, %arg4: memref<128x32xbf16, #tpu.memory_space<vmem>>, %arg5: memref<1x32xf32, #tpu.memory_space<vmem>>, %arg6: memref<64x32xf32, #tpu.memory_space<vmem>>) attributes {dimension_semantics = [#tpu.dimension_semantics<parallel>], iteration_bounds = array<i64: 2>, scalar_prefetch = 0 : i64, scratch_operands = 0 : i64, tpu.core_type = #tpu.core_type<tc>, window_params = [{transform_indices = @transform_0, window_bounds = array<i64: 64, 32>}, {pipeline_mode = #tpu.pipeline_mode<synchronous>, transform_indices = @transform_1, window_bounds = array<i64: 32, 256>}, {pipeline_mode = #tpu.pipeline_mode<synchronous>, transform_indices = @transform_2, window_bounds = array<i64: 1, 256>}, {pipeline_mode = #tpu.pipeline_mode<synchronous>, transform_indices = @transform_3, window_bounds = array<i64: 128, 32>}, {pipeline_mode = #tpu.pipeline_mode<synchronous>, transform_indices = @transform_4, window_bounds = array<i64: 1, 32>}, {transform_indices = @transform_5, window_bounds = array<i64: 64, 32>}]} {
    %c0 = arith.constant 0 : index
    %c0_0 = arith.constant 0 : index
    %0 = vector.load %arg1[%c0, %c0_0] : memref<64x32xbf16, #tpu.memory_space<vmem>>, vector<64x32xbf16>
    %cst = arith.constant 0.000000e+00 : f32
    %1 = vector.broadcast %cst : f32 to vector<64x32xf32>
    %c0_i32 = arith.constant 0 : i32
    %c256_i32 = arith.constant 256 : i32
    %2 = arith.muli %c0_i32, %c256_i32 : i32
    %3 = tpu.assume_multiple %2, 128 : i32
    %c128_i32 = arith.constant 128 : i32
    %4 = arith.muli %c0_i32, %c128_i32 : i32
    %5 = tpu.assume_multiple %4, 128 : i32
    %c0_1 = arith.constant 0 : index
    %6 = arith.index_cast %3 : i32 to index
    %7 = vector.load %arg2[%c0_1, %6] : memref<32x256xbf16, #tpu.memory_space<vmem>>, vector<32x256xbf16>
    %c0_2 = arith.constant 0 : index
    %8 = arith.index_cast %3 : i32 to index
    %9 = vector.load %arg3[%c0_2, %8] : memref<1x256xf32, #tpu.memory_space<vmem>>, vector<1x256xf32>
    %10 = arith.index_cast %5 : i32 to index
    %c0_3 = arith.constant 0 : index
    %11 = vector.load %arg4[%10, %c0_3] : memref<128x32xbf16, #tpu.memory_space<vmem>>, vector<128x32xbf16>
    %cst_4 = arith.constant dense<0.000000e+00> : vector<64x256xf32>
    %12 = tpu.matmul %0, %7, %cst_4 {dimension_numbers = #tpu.dot_dimension_numbers<[1], [0], [0], [1], [0, 0, 1, 1], [], []>} : vector<64x32xbf16>, vector<32x256xbf16>, vector<64x256xf32> -> vector<64x256xf32>
    %13 = vector.broadcast %9 : vector<1x256xf32> to vector<64x256xf32>
    %14 = arith.addf %12, %13 : vector<64x256xf32>
    %15 = vector.extract_strided_slice %14 {offsets = [0, 0], sizes = [64, 128], strides = [1, 1]} : vector<64x256xf32> to vector<64x128xf32>
    %16 = vector.extract_strided_slice %14 {offsets = [0, 128], sizes = [64, 128], strides = [1, 1]} : vector<64x256xf32> to vector<64x128xf32>
    %17 = arith.negf %16 : vector<64x128xf32>
    %18 = math.exp %17 : vector<64x128xf32>
    %cst_5 = arith.constant 1.000000e+00 : f32
    %19 = vector.broadcast %cst_5 : f32 to vector<64x128xf32>
    %20 = arith.addf %19, %18 : vector<64x128xf32>
    %21 = arith.divf %19, %20 : vector<64x128xf32>
    %22 = arith.mulf %16, %21 : vector<64x128xf32>
    %23 = arith.mulf %15, %22 : vector<64x128xf32>
    %24 = arith.truncf %23 : vector<64x128xf32> to vector<64x128xbf16>
    %cst_6 = arith.constant dense<0.000000e+00> : vector<64x32xf32>
    %25 = tpu.matmul %24, %11, %cst_6 {dimension_numbers = #tpu.dot_dimension_numbers<[1], [0], [0], [1], [0, 0, 1, 1], [], []>} : vector<64x128xbf16>, vector<128x32xbf16>, vector<64x32xf32> -> vector<64x32xf32>
    %26 = arith.addf %1, %25 : vector<64x32xf32>
    %c1_i32 = arith.constant 1 : i32
    %c0_7 = arith.constant 0 : index
    %c0_8 = arith.constant 0 : index
    %27 = vector.load %arg5[%c0_7, %c0_8] : memref<1x32xf32, #tpu.memory_space<vmem>>, vector<1x32xf32>
    %28 = vector.broadcast %27 : vector<1x32xf32> to vector<64x32xf32>
    %29 = arith.addf %26, %28 : vector<64x32xf32>
    %c0_9 = arith.constant 0 : index
    %c0_10 = arith.constant 0 : index
    %30 = vector.load %arg6[%c0_9, %c0_10] : memref<64x32xf32, #tpu.memory_space<vmem>>, vector<64x32xf32>
    tpu.vector_store %arg6[%c0_9, %c0_10], %29 {strides = array<i32>} : memref<64x32xf32, #tpu.memory_space<vmem>>, vector<64x32xf32>,
    return
  }
  func.func @transform_0(%arg0: i32) -> (i32, i32) {
    %c0_i32 = arith.constant 0 : i32
    %c0_i32_0 = arith.constant 0 : i32
    return %arg0, %c0_i32 : i32, i32
  }
  func.func @transform_1(%arg0: i32) -> (i32, i32) {
    %c0_i32 = arith.constant 0 : i32
    %c0_i32_0 = arith.constant 0 : i32
    %c0_i32_1 = arith.constant 0 : i32
    return %c0_i32, %c0_i32_0 : i32, i32
  }
  func.func @transform_2(%arg0: i32) -> (i32, i32) {
    %c0_i32 = arith.constant 0 : i32
    %c0_i32_0 = arith.constant 0 : i32
    %c0_i32_1 = arith.constant 0 : i32
    return %c0_i32, %c0_i32_0 : i32, i32
  }
  func.func @transform_3(%arg0: i32) -> (i32, i32) {
    %c0_i32 = arith.constant 0 : i32
    %c0_i32_0 = arith.constant 0 : i32
    %c0_i32_1 = arith.constant 0 : i32
    return %c0_i32, %c0_i32_0 : i32, i32
  }
  func.func @transform_4(%arg0: i32) -> (i32, i32) {
    %c0_i32 = arith.constant 0 : i32
    %c0_i32_0 = arith.constant 0 : i32
    %c0_i32_1 = arith.constant 0 : i32
    return %c0_i32, %c0_i32_0 : i32, i32
  }
  func.func @transform_5(%arg0: i32) -> (i32, i32) {
    %c0_i32 = arith.constant 0 : i32
    %c0_i32_0 = arith.constant 0 : i32
    return %arg0, %c0_i32 : i32, i32
  }
}

</mosaic_0001>

<llo_original>
// kernel: mlp_forward.1
$region0: #{mlp_forward.1}
  #allocation0 [shape = 'u32[]', space=smem, size = 0x4, offset = 0x4, fixed_abs, tag = 'smem constant byte address 0x4 - core index']
  #allocation1 [shape = 'u32[72,128]{1,0:T(1,128)}', space=vmem, size = 0x9000, scoped, tag = 'internal scratch']
  %s0 = inlined_call_operand.vmem [shape: bf16[128,32], index: 0, kind: input, shape index: {}]
  %s1 = inlined_call_operand.vmem [shape: bf16[32,256], index: 1, kind: input, shape index: {}]
  %s2 = inlined_call_operand.vmem [shape: f32[1,256], index: 2, kind: input, shape index: {}]
  %s3 = inlined_call_operand.vmem [shape: bf16[128,32], index: 3, kind: input, shape index: {}]
  %s4 = inlined_call_operand.vmem [shape: f32[1,32], index: 4, kind: input, shape index: {}]
  %s5 = inlined_call_operand.vmem [shape: f32[128,32], index: 5, kind: output, shape index: {}]
  %s6 = sld [smem:[#allocation0]]
  $region53: #{mlp_forward.1} parent=0
    _
  %s8 = ssub.s32 1, %s6
  %s9 = scalar_select 0, %s8, %s6
  loop: start=0, step=1, limit=4
  $region2: #{mlp_forward.1} parent=0 // loop_pre_header
    _
  $region3: #{mlp_forward.1} parent=0 // loop_header
    %s11 = sphi 0, %s15
    %p12 = scmp.ge.s32.totalorder %s11, 4
    %s21 = sphi 0, %s23
    %s24 = sphi 0, %s21
    %s25 = sphi 0, %s24
    %s41 = sphi 0, %s25
    %s45 = sphi 0, %s45
    %s47 = sphi 0, %s45
    %s48 = sphi 0, %s47
    %s62 = sphi 0, %s48
    %s66 = sphi 0, %s66
    %s68 = sphi 0, %s66
    %s69 = sphi 0, %s68
    %s83 = sphi 0, %s69
    %s87 = sphi 0, %s87
    %s89 = sphi 0, %s87
    %s90 = sphi 0, %s89
    %s104 = sphi 0, %s90
    %s108 = sphi 0, %s108
    %s110 = sphi 0, %s108
    %s111 = sphi 0, %s110
    %s125 = sphi 0, %s111
    %s131 = sphi 0, %s133
    %s134 = sphi 0, %s131
    %s135 = sphi 0, %s134
    %s151 = sphi 0, %s135
  $region4: #{mlp_forward.1} parent=0 // loop_header_branch
    %14 = sbr.rel (%p12) target = $region8
  $region5: #{mlp_forward.1} parent=0 // loop_body
    %s16 = ssub.s32 %s11, 1
    %s17 = ssub.s32 %s11, 2
    %s18 = sadd.s32 %s11, 1
    %s19 = ssub.s32 %s11, %s18
    %p20 = scmp.eq.s32.totalorder %s19, 0
    %s22 = sadd.s32 %s21, 1
    %s23 = scalar_select %p20, %s21, %s22
    %p26 = pneg %p20
    %p27 = scmp.eq.s32.totalorder %s11, 1
    %p28 = por %p26, %p27
    %p29 = scmp.ne.s32.totalorder %s21, %s24
    %p30 = scmp.eq.s32.totalorder %s11, 0
    %p31 = por %p29, %p30
    %p32 = scmp.ne.s32.totalorder %s21, %s24
    %p33 = scmp.eq.s32.totalorder %s16, 1
    %p34 = por %p32, %p33
    %p35 = scmp.ne.s32.totalorder %s24, %s25
    %p36 = scmp.eq.s32.totalorder %s16, 0
    %p37 = por %p35, %p36
    %p38 = scmp.ne.s32.totalorder %s24, %s25
    %p39 = scmp.eq.s32.totalorder %s17, 1
    %p40 = por %p38, %p39
    %p42 = scmp.ne.s32.totalorder %s25, %s41
    %p43 = scmp.eq.s32.totalorder %s17, 0
    %p44 = por %p42, %p43
    %s46 = sadd.s32 %s45, 1
    %p49 = scmp.eq.s32.totalorder %s11, 1
    %p50 = scmp.ne.s32.totalorder %s45, %s47
    %p51 = scmp.eq.s32.totalorder %s11, 0
    %p52 = por %p50, %p51
    %p53 = scmp.ne.s32.totalorder %s45, %s47
    %p54 = scmp.eq.s32.totalorder %s16, 1
    %p55 = por %p53, %p54
    %p56 = scmp.ne.s32.totalorder %s47, %s48
    %p57 = scmp.eq.s32.totalorder %s16, 0
    %p58 = por %p56, %p57
    %p59 = scmp.ne.s32.totalorder %s47, %s48
    %p60 = scmp.eq.s32.totalorder %s17, 1
    %p61 = por %p59, %p60
    %p63 = scmp.ne.s32.totalorder %s48, %s62
    %p64 = scmp.eq.s32.totalorder %s17, 0
    %p65 = por %p63, %p64
    %s67 = sadd.s32 %s66, 1
    %p70 = scmp.eq.s32.totalorder %s11, 1
    %p71 = scmp.ne.s32.totalorder %s66, %s68
    %p72 = scmp.eq.s32.totalorder %s11, 0
    %p73 = por %p71, %p72
    %p74 = scmp.ne.s32.totalorder %s66, %s68
    %p75 = scmp.eq.s32.totalorder %s16, 1
    %p76 = por %p74, %p75
    %p77 = scmp.ne.s32.totalorder %s68, %s69
    %p78 = scmp.eq.s32.totalorder %s16, 0
    %p79 = por %p77, %p78
    %p80 = scmp.ne.s32.totalorder %s68, %s69
    %p81 = scmp.eq.s32.totalorder %s17, 1
    %p82 = por %p80, %p81
    %p84 = scmp.ne.s32.totalorder %s69, %s83
    %p85 = scmp.eq.s32.totalorder %s17, 0
    %p86 = por %p84, %p85
    %s88 = sadd.s32 %s87, 1
    %p91 = scmp.eq.s32.totalorder %s11, 1
    %p92 = scmp.ne.s32.totalorder %s87, %s89
    %p93 = scmp.eq.s32.totalorder %s11, 0
    %p94 = por %p92, %p93
    %p95 = scmp.ne.s32.totalorder %s87, %s89
    %p96 = scmp.eq.s32.totalorder %s16, 1
    %p97 = por %p95, %p96
    %p98 = scmp.ne.s32.totalorder %s89, %s90
    %p99 = scmp.eq.s32.totalorder %s16, 0
    %p100 = por %p98, %p99
    %p101 = scmp.ne.s32.totalorder %s89, %s90
    %p102 = scmp.eq.s32.totalorder %s17, 1
    %p103 = por %p101, %p102
    %p105 = scmp.ne.s32.totalorder %s90, %s104
    %p106 = scmp.eq.s32.totalorder %s17, 0
    %p107 = por %p105, %p106
    %s109 = sadd.s32 %s108, 1
    %p112 = scmp.eq.s32.totalorder %s11, 1
    %p113 = scmp.ne.s32.totalorder %s108, %s110
    %p114 = scmp.eq.s32.totalorder %s11, 0
    %p115 = por %p113, %p114
    %p116 = scmp.ne.s32.totalorder %s108, %s110
    %p117 = scmp.eq.s32.totalorder %s16, 1
    %p118 = por %p116, %p117
    %p119 = scmp.ne.s32.totalorder %s110, %s111
    %p120 = scmp.eq.s32.totalorder %s16, 0
    %p121 = por %p119, %p120
    %p122 = scmp.ne.s32.totalorder %s110, %s111
    %p123 = scmp.eq.s32.totalorder %s17, 1
    %p124 = por %p122, %p123
    %p126 = scmp.ne.s32.totalorder %s111, %s125
    %p127 = scmp.eq.s32.totalorder %s17, 0
    %p128 = por %p126, %p127
    %s129 = ssub.s32 %s11, %s18
    %p130 = scmp.eq.s32.totalorder %s129, 0
    %s132 = sadd.s32 %s131, 1
    %s133 = scalar_select %p130, %s131, %s132
    %p136 = pneg %p130
    %p137 = scmp.eq.s32.totalorder %s11, 1
    %p138 = por %p136, %p137
    %p139 = scmp.ne.s32.totalorder %s131, %s134
    %p140 = scmp.eq.s32.totalorder %s11, 0
    %p141 = por %p139, %p140
    %p142 = scmp.ne.s32.totalorder %s131, %s134
    %p143 = scmp.eq.s32.totalorder %s16, 1
    %p144 = por %p142, %p143
    %p145 = scmp.ne.s32.totalorder %s134, %s135
    %p146 = scmp.eq.s32.totalorder %s16, 0
    %p147 = por %p145, %p146
    %p148 = scmp.ne.s32.totalorder %s134, %s135
    %p149 = scmp.eq.s32.totalorder %s17, 1
    %p150 = por %p148, %p149
    %p152 = scmp.ne.s32.totalorder %s135, %s151
    %p153 = scmp.eq.s32.totalorder %s17, 0
    %p154 = por %p152, %p153
    %p155 = scmp.le.s32.totalorder 1, %s11
    %p156 = scmp.lt.s32.totalorder %s11, 3
    %p157 = pnand %p155, %p156
    %p158 = pneg %p157
    // Predicated region
    $region9: #{mlp_forward.1} parent=5 // pred_check
      _
    $region10: #{mlp_forward.1} parent=5 // pred_check_branch
      %160 = sbr.rel (%p157) target = $region12
    $region11: #{mlp_forward.1} parent=5 // pred_region
      %s161 = ssub.s32 %s11, 1
      // Predicated region
      $region13: #{mlp_forward.1} parent=11 // pred_check
        %p162 = pneg %p58
      $region14: #{mlp_forward.1} parent=11 // pred_check_branch
        %164 = sbr.rel (%p162) target = $region16
      $region15: #{mlp_forward.1} parent=11 // pred_region
        _
      $region16: #{mlp_forward.1} parent=11 // pred_fallthru
        _
      // Predicated region
      $region17: #{mlp_forward.1} parent=11 // pred_check
        %p165 = pneg %p79
      $region18: #{mlp_forward.1} parent=11 // pred_check_branch
        %167 = sbr.rel (%p165) target = $region20
      $region19: #{mlp_forward.1} parent=11 // pred_region
        _
      $region20: #{mlp_forward.1} parent=11 // pred_fallthru
        _
      // Predicated region
      $region21: #{mlp_forward.1} parent=11 // pred_check
        %p168 = pneg %p100
      $region22: #{mlp_forward.1} parent=11 // pred_check_branch
        %170 = sbr.rel (%p168) target = $region24
      $region23: #{mlp_forward.1} parent=11 // pred_region
        _
      $region24: #{mlp_forward.1} parent=11 // pred_fallthru
        _
      // Predicated region
      $region25: #{mlp_forward.1} parent=11 // pred_check
        %p171 = pneg %p121
      $region26: #{mlp_forward.1} parent=11 // pred_check_branch
        %173 = sbr.rel (%p171) target = $region28
      $region27: #{mlp_forward.1} parent=11 // pred_region
        _
      $region28: #{mlp_forward.1} parent=11 // pred_fallthru
        _
    $region12: #{mlp_forward.1} parent=5 // pred_fallthru
      _
    %p174 = scmp.lt.s32.totalorder %s11, 2
    // Predicated region
    $region29: #{mlp_forward.1} parent=5 // pred_check
      %p175 = pneg %p174
    $region30: #{mlp_forward.1} parent=5 // pred_check_branch
      %177 = sbr.rel (%p175) target = $region32
    $region31: #{mlp_forward.1} parent=5 // pred_region
      // Predicated region
      $region33: #{mlp_forward.1} parent=31 // pred_check
        %p178 = pneg %p31
      $region34: #{mlp_forward.1} parent=31 // pred_check_branch
        %180 = sbr.rel (%p178) target = $region36
      $region35: #{mlp_forward.1} parent=31 // pred_region
        %s181 = smul.u32 8, %s11
        %p182 = scmp.lt.s32.totalorder %s181, 15
        %s183 = scalar_select %p182, %s181, 15
        %s184 = smul.addr %s183, 4
        %s185 = scalar_lea.vmem %s0, %s184
        %s186 = smul.u32 8, %s11
      $region36: #{mlp_forward.1} parent=31 // pred_fallthru
        _
    $region32: #{mlp_forward.1} parent=5 // pred_fallthru
      _
    %p187 = scmp.le.s32.totalorder 1, %s11
    %p188 = scmp.lt.s32.totalorder %s11, 3
    %p189 = pnand %p187, %p188
    %p190 = pneg %p189
    // Predicated region
    $region37: #{mlp_forward.1} parent=5 // pred_check
      _
    $region38: #{mlp_forward.1} parent=5 // pred_check_branch
      %192 = sbr.rel (%p189) target = $region40
    $region39: #{mlp_forward.1} parent=5 // pred_region
      %s193 = ssub.s32 %s11, 1
      %s194 = smul.u32 8, %s16
      %p195 = scmp.lt.s32.totalorder %s194, 15
      %s196 = scalar_select %p195, %s194, 15
      %s197 = smul.addr %s196, 4
      %s198 = scalar_lea.vmem %s0, %s197
      %p199 = pneg %p37
      %p200 = pneg %p34
      %p201 = pneg %p58
      %p202 = pneg %p55
      %p203 = pneg %p79
      %p204 = pneg %p76
      %p205 = pneg %p100
      %p206 = pneg %p97
      %p207 = pneg %p121
      %p208 = pneg %p118
      %p209 = pneg %p147
      %p210 = pneg %p144
      %s211 = smul.u32 8, %s16
      %p212 = scmp.lt.s32.totalorder %s211, 15
      %s213 = scalar_select %p212, %s211, 15
      %s214 = smul.addr %s213, 8
      %s215 = scalar_lea.vmem %s5, %s214
      %s216 = smul.u32 8, %s16
      %p217 = scmp.lt.s32.totalorder %s216, 15
      %s218 = scalar_select %p217, %s216, 15
      %s219 = smul.addr %s218, 4
      %s220 = scalar_lea.vmem %s0, %s219
      %s221 = smul.u32 8, %s16
      %s222 = smul.u32 8, %s16
      %p223 = scmp.lt.s32.totalorder %s222, 15
      %s224 = scalar_select %p223, %s222, 15
      %s225 = smul.addr %s224, 8
      %s226 = scalar_lea.vmem %s5, %s225
      %s227 = smul.u32 8, %s16
      %v229 = vld [vmem:[%s220] sm:$0xf]
      %v230 = vld [vmem:[%s220 + $0x4] sm:$0xf]
      %v231 = vld [vmem:[%s220 + $0x8] sm:$0xf]
      %v232 = vld [vmem:[%s220 + $0xc] sm:$0xf]
      %v233 = vld [vmem:[%s220 + $0x10] sm:$0xf]
      %v234 = vld [vmem:[%s220 + $0x14] sm:$0xf]
      %v235 = vld [vmem:[%s220 + $0x18] sm:$0xf]
      %v236 = vld [vmem:[%s220 + $0x1c] sm:$0xf]
      %v237 = vld [vmem:[%s1] sm:$0xff]
      %v238 = vld [vmem:[%s1 + $0x8] sm:$0xff]
      %v239 = vld [vmem:[%s1 + $0x10] sm:$0xff]
      %v240 = vld [vmem:[%s1 + $0x18] sm:$0xff]
      %v241 = vld [vmem:[%s2] sm:$0x3]
      %v242 = vld [vmem:[%s3] sm:$0xf]
      %v243 = vld [vmem:[%s3 + $0x4] sm:$0xf]
      %v244 = vld [vmem:[%s3 + $0x8] sm:$0xf]
      %v245 = vld [vmem:[%s3 + $0xc] sm:$0xf]
      %v246 = vld [vmem:[%s3 + $0x10] sm:$0xf]
      %v247 = vld [vmem:[%s3 + $0x14] sm:$0xf]
      %v248 = vld [vmem:[%s3 + $0x18] sm:$0xf]
      %v249 = vld [vmem:[%s3 + $0x1c] sm:$0xf]
      %v250 = vld [vmem:[%s3 + $0x20] sm:$0xf]
      %v251 = vld [vmem:[%s3 + $0x24] sm:$0xf]
      %v252 = vld [vmem:[%s3 + $0x28] sm:$0xf]
      %v253 = vld [vmem:[%s3 + $0x2c] sm:$0xf]
      %v254 = vld [vmem:[%s3 + $0x30] sm:$0xf]
      %v255 = vld [vmem:[%s3 + $0x34] sm:$0xf]
      %v256 = vld [vmem:[%s3 + $0x38] sm:$0xf]
      %v257 = vld [vmem:[%s3 + $0x3c] sm:$0xf]
      %v259 = vperm.slane %v241, 0
      %v260 = vperm.slane %v241, 1
      %v271 = vunpack.c.l.b16 %v229
      %v272 = vunpack.c.l.b16 %v230
      %v273 = vunpack.c.l.b16 %v231
      %v274 = vunpack.c.l.b16 %v232
      %v275 = vunpack.c.l.b16 %v233
      %v276 = vunpack.c.l.b16 %v234
      %v277 = vunpack.c.l.b16 %v235
      %v278 = vunpack.c.l.b16 %v236
      %v279 = vpack.c.b16 %v272, %v271
      %v280 = vpack.c.b16 %v274, %v273
      %v281 = vpack.c.b16 %v276, %v275
      %v282 = vpack.c.b16 %v278, %v277
      %v287 = vunpack.c.l.b16 %v237
      %v288 = vunpack.c.h.b16 %v237
      %v289 = vunpack.c.l.b16 %v238
      %v290 = vunpack.c.h.b16 %v238
      %v291 = vunpack.c.l.b16 %v239
      %v292 = vunpack.c.h.b16 %v239
      %v293 = vunpack.c.l.b16 %v240
      %v294 = vunpack.c.h.b16 %v240
      %v295 = vpack.c.b16 %v289, %v287
      %v296 = vpack.c.b16 %v290, %v288
      %v297 = vpack.c.b16 %v293, %v291
      %v298 = vpack.c.b16 %v294, %v292
      %vm303 = vcmask 261120
      %v305 = vsel %vm303, %v279, 0
      %v308 = vsel %vm303, %v280, 0
      %v311 = vsel %vm303, %v281, 0
      %v314 = vsel %vm303, %v282, 0
      %316 = vmatpush.bf16.msra.mxu0 0
      %317 = vmatpush.bf16.msra.mxu0 0
      %318 = vmatpush.bf16.msra.mxu0 0
      %319 = vmatpush.bf16.msra.mxu0 0
      %320 = vmatpush.bf16.msra.mxu0 0
      %321 = vmatpush.bf16.msra.mxu0 0
      %322 = vmatpush.bf16.msra.mxu0 %v297
      %323 = vmatpush.bf16.msra.mxu0 %v295
      %324 = vmatmul.bf16.gmra.mxu0 %v305
      %v325 = vpop.f32.mrf.mxu0
      %v326 = vadd.f32 %v259, %v325
      %v327 = vpop.f32.mrf.mxu0
      %v328 = vadd.f32 %v259, %v327
      %329 = vmatmul.bf16.gmra.mxu0 %v308
      %v330 = vpop.f32.mrf.mxu0
      %v331 = vadd.f32 %v259, %v330
      %v332 = vpop.f32.mrf.mxu0
      %v333 = vadd.f32 %v259, %v332
      %334 = vmatmul.bf16.gmra.mxu0 %v311
      %v335 = vpop.f32.mrf.mxu0
      %v336 = vadd.f32 %v259, %v335
      %v337 = vpop.f32.mrf.mxu0
      %v338 = vadd.f32 %v259, %v337
      %339 = vmatmul.bf16.gmra.mxu0 %v314
      %v340 = vpop.f32.mrf.mxu0
      %v341 = vadd.f32 %v259, %v340
      %v342 = vpop.f32.mrf.mxu0
      %v343 = vadd.f32 %v259, %v342
      %344 = vdwg.mxu0
      %345 = vmatpush.bf16.msra.mxu0 0
      %346 = vmatpush.bf16.msra.mxu0 0
      %347 = vmatpush.bf16.msra.mxu0 0
      %348 = vmatpush.bf16.msra.mxu0 0
      %349 = vmatpush.bf16.msra.mxu0 0
      %350 = vmatpush.bf16.msra.mxu0 0
      %351 = vmatpush.bf16.msra.mxu0 %v298
      %352 = vmatpush.bf16.msra.mxu0 %v296
      %353 = vmatmul.bf16.gmra.mxu0 %v305
      %v354 = vpop.f32.mrf.mxu0
      %v355 = vadd.f32 %v260, %v354
      %v356 = vpop.f32.mrf.mxu0
      %v357 = vadd.f32 %v260, %v356
      %358 = vmatmul.bf16.gmra.mxu0 %v308
      %v359 = vpop.f32.mrf.mxu0
      %v360 = vadd.f32 %v260, %v359
      %v361 = vpop.f32.mrf.mxu0
      %v362 = vadd.f32 %v260, %v361
      %363 = vmatmul.bf16.gmra.mxu0 %v311
      %v364 = vpop.f32.mrf.mxu0
      %v365 = vadd.f32 %v260, %v364
      %v366 = vpop.f32.mrf.mxu0
      %v367 = vadd.f32 %v260, %v366
      %368 = vmatmul.bf16.gmra.mxu0 %v314
      %v369 = vpop.f32.mrf.mxu0
      %v370 = vadd.f32 %v260, %v369
      %v371 = vpop.f32.mrf.mxu0
      %v372 = vadd.f32 %v260, %v371
      %373 = vdwg.mxu0
      %v374 = vxor.u32 %v355, 2147483648
      %v375 = vxor.u32 %v357, 2147483648
      %v376 = vxor.u32 %v360, 2147483648
      %v377 = vxor.u32 %v362, 2147483648
      %v378 = vxor.u32 %v365, 2147483648
      %v379 = vxor.u32 %v367, 2147483648
      %v380 = vxor.u32 %v370, 2147483648
      %v381 = vxor.u32 %v372, 2147483648
      %v382 = vmul.f32 %v374, 1.442695
      %v383 = vpow.pop %v382
      %v384 = vmul.f32 %v375, 1.442695
      %v385 = vpow.pop %v384
      %v386 = vmul.f32 %v376, 1.442695
      %v387 = vpow.pop %v386
      %v388 = vmul.f32 %v377, 1.442695
      %v389 = vpow.pop %v388
      %v390 = vmul.f32 %v378, 1.442695
      %v391 = vpow.pop %v390
      %v392 = vmul.f32 %v379, 1.442695
      %v393 = vpow.pop %v392
      %v394 = vmul.f32 %v380, 1.442695
      %v395 = vpow.pop %v394
      %v396 = vmul.f32 %v381, 1.442695
      %v397 = vpow.pop %v396
      %v398 = vadd.f32 %v383, 1.0
      %v399 = vadd.f32 %v385, 1.0
      %v400 = vadd.f32 %v387, 1.0
      %v401 = vadd.f32 %v389, 1.0
      %v402 = vadd.f32 %v391, 1.0
      %v403 = vadd.f32 %v393, 1.0
      %v404 = vadd.f32 %v395, 1.0
      %v405 = vadd.f32 %v397, 1.0
      %v406 = vrcp.pop %v398
      %v407 = vmul.f32 %v398, %v406
      %v408 = vsub.f32 1.0, %v407
      %v409 = vmul.f32 %v406, %v408
      %v410 = vadd.f32 %v406, %v409
      %vm411 = vweird.f32 %v398
      %vm412 = vweird.f32 %v406
      %vm413 = vmor %vm411, %vm412
      %v414 = vsel %vm413, %v406, %v410
      %v415 = vand.u32 2147483647, %v398
      %vm416 = vcmp.eq.f32.partialorder %v415, 8.507059e+37
      %v417 = vand.u32 %v398, 2147483648
      %v418 = vor.u32 1.1754944e-38, %v417
      %v419 = vsel %vm416, %v418, %v414
      %v420 = vmul.f32 1.0, %v419
      %v421 = vrcp.pop %v399
      %v422 = vmul.f32 %v399, %v421
      %v423 = vsub.f32 1.0, %v422
      %v424 = vmul.f32 %v421, %v423
      %v425 = vadd.f32 %v421, %v424
      %vm426 = vweird.f32 %v399
      %vm427 = vweird.f32 %v421
      %vm428 = vmor %vm426, %vm427
      %v429 = vsel %vm428, %v421, %v425
      %v430 = vand.u32 2147483647, %v399
      %vm431 = vcmp.eq.f32.partialorder %v430, 8.507059e+37
      %v432 = vand.u32 %v399, 2147483648
      %v433 = vor.u32 1.1754944e-38, %v432
      %v434 = vsel %vm431, %v433, %v429
      %v435 = vmul.f32 1.0, %v434
      %v436 = vrcp.pop %v400
      %v437 = vmul.f32 %v400, %v436
      %v438 = vsub.f32 1.0, %v437
      %v439 = vmul.f32 %v436, %v438
      %v440 = vadd.f32 %v436, %v439
      %vm441 = vweird.f32 %v400
      %vm442 = vweird.f32 %v436
      %vm443 = vmor %vm441, %vm442
      %v444 = vsel %vm443, %v436, %v440
      %v445 = vand.u32 2147483647, %v400
      %vm446 = vcmp.eq.f32.partialorder %v445, 8.507059e+37
      %v447 = vand.u32 %v400, 2147483648
      %v448 = vor.u32 1.1754944e-38, %v447
      %v449 = vsel %vm446, %v448, %v444
      %v450 = vmul.f32 1.0, %v449
      %v451 = vrcp.pop %v401
      %v452 = vmul.f32 %v401, %v451
      %v453 = vsub.f32 1.0, %v452
      %v454 = vmul.f32 %v451, %v453
      %v455 = vadd.f32 %v451, %v454
      %vm456 = vweird.f32 %v401
      %vm457 = vweird.f32 %v451
      %vm458 = vmor %vm456, %vm457
      %v459 = vsel %vm458, %v451, %v455
      %v460 = vand.u32 2147483647, %v401
      %vm461 = vcmp.eq.f32.partialorder %v460, 8.507059e+37
      %v462 = vand.u32 %v401, 2147483648
      %v463 = vor.u32 1.1754944e-38, %v462
      %v464 = vsel %vm461, %v463, %v459
      %v465 = vmul.f32 1.0, %v464
      %v466 = vrcp.pop %v402
      %v467 = vmul.f32 %v402, %v466
      %v468 = vsub.f32 1.0, %v467
      %v469 = vmul.f32 %v466, %v468
      %v470 = vadd.f32 %v466, %v469
      %vm471 = vweird.f32 %v402
      %vm472 = vweird.f32 %v466
      %vm473 = vmor %vm471, %vm472
      %v474 = vsel %vm473, %v466, %v470
      %v475 = vand.u32 2147483647, %v402
      %vm476 = vcmp.eq.f32.partialorder %v475, 8.507059e+37
      %v477 = vand.u32 %v402, 2147483648
      %v478 = vor.u32 1.1754944e-38, %v477
      %v479 = vsel %vm476, %v478, %v474
      %v480 = vmul.f32 1.0, %v479
      %v481 = vrcp.pop %v403
      %v482 = vmul.f32 %v403, %v481
      %v483 = vsub.f32 1.0, %v482
      %v484 = vmul.f32 %v481, %v483
      %v485 = vadd.f32 %v481, %v484
      %vm486 = vweird.f32 %v403
      %vm487 = vweird.f32 %v481
      %vm488 = vmor %vm486, %vm487
      %v489 = vsel %vm488, %v481, %v485
      %v490 = vand.u32 2147483647, %v403
      %vm491 = vcmp.eq.f32.partialorder %v490, 8.507059e+37
      %v492 = vand.u32 %v403, 2147483648
      %v493 = vor.u32 1.1754944e-38, %v492
      %v494 = vsel %vm491, %v493, %v489
      %v495 = vmul.f32 1.0, %v494
      %v496 = vrcp.pop %v404
      %v497 = vmul.f32 %v404, %v496
      %v498 = vsub.f32 1.0, %v497
      %v499 = vmul.f32 %v496, %v498
      %v500 = vadd.f32 %v496, %v499
      %vm501 = vweird.f32 %v404
      %vm502 = vweird.f32 %v496
      %vm503 = vmor %vm501, %vm502
      %v504 = vsel %vm503, %v496, %v500
      %v505 = vand.u32 2147483647, %v404
      %vm506 = vcmp.eq.f32.partialorder %v505, 8.507059e+37
      %v507 = vand.u32 %v404, 2147483648
      %v508 = vor.u32 1.1754944e-38, %v507
      %v509 = vsel %vm506, %v508, %v504
      %v510 = vmul.f32 1.0, %v509
      %v511 = vrcp.pop %v405
      %v512 = vmul.f32 %v405, %v511
      %v513 = vsub.f32 1.0, %v512
      %v514 = vmul.f32 %v511, %v513
      %v515 = vadd.f32 %v511, %v514
      %vm516 = vweird.f32 %v405
      %vm517 = vweird.f32 %v511
      %vm518 = vmor %vm516, %vm517
      %v519 = vsel %vm518, %v511, %v515
      %v520 = vand.u32 2147483647, %v405
      %vm521 = vcmp.eq.f32.partialorder %v520, 8.507059e+37
      %v522 = vand.u32 %v405, 2147483648
      %v523 = vor.u32 1.1754944e-38, %v522
      %v524 = vsel %vm521, %v523, %v519
      %v525 = vmul.f32 1.0, %v524
      %v526 = vmul.f32 %v355, %v420
      %v527 = vmul.f32 %v357, %v435
      %v528 = vmul.f32 %v360, %v450
      %v529 = vmul.f32 %v362, %v465
      %v530 = vmul.f32 %v365, %v480
      %v531 = vmul.f32 %v367, %v495
      %v532 = vmul.f32 %v370, %v510
      %v533 = vmul.f32 %v372, %v525
      %v534 = vmul.f32 %v326, %v526
      %v535 = vmul.f32 %v328, %v527
      %v536 = vmul.f32 %v331, %v528
      %v537 = vmul.f32 %v333, %v529
      %v538 = vmul.f32 %v336, %v530
      %v539 = vmul.f32 %v338, %v531
      %v540 = vmul.f32 %v341, %v532
      %v541 = vmul.f32 %v343, %v533
      %v542 = vpack.c.bf16 %v535, %v534
      %v543 = vpack.c.bf16 %v537, %v536
      %v544 = vpack.c.bf16 %v539, %v538
      %v545 = vpack.c.bf16 %v541, %v540
      %v546 = vld [vmem:[%s4] sm:$0x1]
      %v548 = vperm.slane %v546, 0
      %v566 = vunpack.c.l.b16 %v242
      %v567 = vunpack.c.l.b16 %v243
      %v568 = vunpack.c.l.b16 %v244
      %v569 = vunpack.c.l.b16 %v245
      %v570 = vunpack.c.l.b16 %v246
      %v571 = vunpack.c.l.b16 %v247
      %v572 = vunpack.c.l.b16 %v248
      %v573 = vunpack.c.l.b16 %v249
      %v574 = vunpack.c.l.b16 %v250
      %v575 = vunpack.c.l.b16 %v251
      %v576 = vunpack.c.l.b16 %v252
      %v577 = vunpack.c.l.b16 %v253
      %v578 = vunpack.c.l.b16 %v254
      %v579 = vunpack.c.l.b16 %v255
      %v580 = vunpack.c.l.b16 %v256
      %v581 = vunpack.c.l.b16 %v257
      %v582 = vpack.c.b16 %v567, %v566
      %v583 = vpack.c.b16 %v569, %v568
      %v584 = vpack.c.b16 %v571, %v570
      %v585 = vpack.c.b16 %v573, %v572
      %v586 = vpack.c.b16 %v575, %v574
      %v587 = vpack.c.b16 %v577, %v576
      %v588 = vpack.c.b16 %v579, %v578
      %v589 = vpack.c.b16 %v581, %v580
      %598 = vmatpush.bf16.msra.mxu0 %v589
      %599 = vmatpush.bf16.msra.mxu0 %v588
      %600 = vmatpush.bf16.msra.mxu0 %v587
      %601 = vmatpush.bf16.msra.mxu0 %v586
      %602 = vmatpush.bf16.msra.mxu0 %v585
      %603 = vmatpush.bf16.msra.mxu0 %v584
      %604 = vmatpush.bf16.msra.mxu0 %v583
      %605 = vmatpush.bf16.msra.mxu0 %v582
      %606 = vmatmul.bf16.gmra.mxu0 %v542
      %v607 = vpop.f32.mrf.mxu0
      %v608 = vadd.f32 %v548, %v607
      %v609 = vpop.f32.mrf.mxu0
      %v610 = vadd.f32 %v548, %v609
      %611 = vmatmul.bf16.gmra.mxu0 %v543
      %v612 = vpop.f32.mrf.mxu0
      %v613 = vadd.f32 %v548, %v612
      %v614 = vpop.f32.mrf.mxu0
      %v615 = vadd.f32 %v548, %v614
      %616 = vmatmul.bf16.gmra.mxu0 %v544
      %v617 = vpop.f32.mrf.mxu0
      %v618 = vadd.f32 %v548, %v617
      %v619 = vpop.f32.mrf.mxu0
      %v620 = vadd.f32 %v548, %v619
      %621 = vmatmul.bf16.gmra.mxu0 %v545
      %v622 = vpop.f32.mrf.mxu0
      %v623 = vadd.f32 %v548, %v622
      %v624 = vpop.f32.mrf.mxu0
      %v625 = vadd.f32 %v548, %v624
      %626 = vdwg.mxu0
      %627 = vst.msk [vmem:[%s226] sm:$0xff] %vm303, %v608
      %628 = vst.msk [vmem:[%s226 + $0x8] sm:$0xff] %vm303, %v610
      %629 = vst.msk [vmem:[%s226 + $0x10] sm:$0xff] %vm303, %v613
      %630 = vst.msk [vmem:[%s226 + $0x18] sm:$0xff] %vm303, %v615
      %631 = vst.msk [vmem:[%s226 + $0x20] sm:$0xff] %vm303, %v618
      %632 = vst.msk [vmem:[%s226 + $0x28] sm:$0xff] %vm303, %v620
      %633 = vst.msk [vmem:[%s226 + $0x30] sm:$0xff] %vm303, %v623
      %634 = vst.msk [vmem:[%s226 + $0x38] sm:$0xff] %vm303, %v625
      %s635 = smul.u32 8, %s16
      %p636 = scmp.lt.s32.totalorder %s635, 15
      %s637 = scalar_select %p636, %s635, 15
      %s638 = smul.addr %s637, 8
      %s639 = scalar_lea.vmem %s5, %s638
      // Predicated region
      $region41: #{mlp_forward.1} parent=39 // pred_check
        %p640 = pneg %p144
      $region42: #{mlp_forward.1} parent=39 // pred_check_branch
        %642 = sbr.rel (%p640) target = $region44
      $region43: #{mlp_forward.1} parent=39 // pred_region
        %s643 = smul.u32 8, %s16
      $region44: #{mlp_forward.1} parent=39 // pred_fallthru
        _
    $region40: #{mlp_forward.1} parent=5 // pred_fallthru
      _
    %p644 = scmp.le.s32.totalorder 2, %s11
    // Predicated region
    $region45: #{mlp_forward.1} parent=5 // pred_check
      %p645 = pneg %p644
    $region46: #{mlp_forward.1} parent=5 // pred_check_branch
      %647 = sbr.rel (%p645) target = $region48
    $region47: #{mlp_forward.1} parent=5 // pred_region
      %s648 = ssub.s32 %s11, 2
      // Predicated region
      $region49: #{mlp_forward.1} parent=47 // pred_check
        %p649 = pneg %p150
      $region50: #{mlp_forward.1} parent=47 // pred_check_branch
        %651 = sbr.rel (%p649) target = $region52
      $region51: #{mlp_forward.1} parent=47 // pred_region
        %s652 = smul.u32 8, %s17
        %p653 = scmp.lt.s32.totalorder %s652, 15
        %s654 = scalar_select %p653, %s652, 15
        %s655 = smul.addr %s654, 8
        %s656 = scalar_lea.vmem %s5, %s655
      $region52: #{mlp_forward.1} parent=47 // pred_fallthru
        _
    $region48: #{mlp_forward.1} parent=5 // pred_fallthru
      _
  $region6: #{mlp_forward.1} parent=0 // loop_footer
    %s15 = sadd.s32 1, %s11
  $region7: #{mlp_forward.1} parent=0 // loop_footer_branch
    %10 = sbr.rel target = $region3
  $region8: #{mlp_forward.1} parent=0 // loop_exit
    _

</llo_original>
